<compile_context>
chip_gen: v7x
topology: tpu7x:2x2x1
jax: 0.10.0
libtpu: 0.0.40
codegen_flags: <defaults>
</compile_context>

<pallas_src>
import functools

import jax
import jax.numpy as jnp
from jax import lax
from jax.experimental import pallas as pl
from jax.experimental.pallas import tpu as pltpu

_BIG = 1e30  # padding sentinel (f32-safe); relu() maps padded rows/cols to exactly 0


def _round_up(x, m):
    return ((x + m - 1) // m) * m


def _sublane_packing(dtype):
    # 8 rows for 32-bit, 16 for bf16/fp16, 32 for int8/fp8 (packed vreg sublanes).
    return 8 * max(1, 4 // jnp.dtype(dtype).itemsize)


def _vmem_bytes(ti, tj, d_p, in_itemsize):
    main = 2 * (ti + tj) * d_p * in_itemsize      # im + ex tiles, double-buffered
    vecs = 2 * 4 * (2 * ti + tj)                  # row_bias(+im_sq) + j-vector, f32
    acc = ti * tj * 4                             # f32 accumulator scratch
    out = 2 * 8 * 128 * 4                         # lane-dense output slab
    return main + vecs + acc + out


def _vmem_limit_cap():
    try:
        phys = int(pltpu.get_tpu_info().vmem_capacity_bytes)
    except Exception:          # not on TPU / older JAX: assume v7x (64 MiB), be safe
        phys = 64 * 1024 * 1024
    return min((phys * 3) // 4, 96 * 1024 * 1024)


def _cap_only_kernel(*refs, measure, max_violation, has_col_bias):
    """Grid = (i over im rows [parallel], j over ex_s rows [arbitrary/reduction])."""
    if measure == 'l2':
        row_bias_ref, ex_sq_ref, im_sq_ref, im_ref, ex_ref, out_ref, acc_ref = refs
    elif has_col_bias:
        row_bias_ref, col_bias_ref, im_ref, ex_ref, out_ref, acc_ref = refs
    else:
        row_bias_ref, im_ref, ex_ref, out_ref, acc_ref = refs

    # Grid queries only at the top level of the kernel (never inside pl.when).
    j = pl.program_id(1)
    nj = pl.num_programs(1)

    @pl.when(j == 0)
    def _():
        acc_ref[...] = jnp.zeros_like(acc_ref)

    # scores tile via MXU: contract last dims of both operands (no in-kernel
    # transpose), native-dtype operands, f32 accumulation.
    gram = lax.dot_general(im_ref[...], ex_ref[...],
                           dimension_numbers=(((1,), (1,)), ((), ())),
                           preferred_element_type=jnp.float32)        # (TI, TJ) f32

    row_bias = row_bias_ref[...]                   # (TI, 1): margin - diag, -BIG on pad rows
    if measure == 'l2':
        # ||im - ex||^2 = im_sq + ex_sq - 2*gram (norms precomputed in the wrapper;
        # padded ex columns carry +BIG so their cost clamps to 0).
        dist2 = jnp.maximum(im_sq_ref[...] + ex_sq_ref[...] - 2.0 * gram, 0.0)
        cost = jnp.maximum(row_bias - jnp.sqrt(dist2), 0.0)
    else:
        sc = gram + row_bias
        if has_col_bias:                           # only present when columns are padded
            sc = sc + col_bias_ref[...]            # (1, TJ): 0 valid / -BIG padded
        cost = jnp.maximum(sc, 0.0)

    # Lane-dense running reduction across the j (reduction) axis.
    if max_violation:
        acc_ref[...] = jnp.maximum(acc_ref[...], cost)
    else:
        acc_ref[...] = acc_ref[...] + cost

    @pl.when(j == nj - 1)
    def _():
        acc = acc_ref[...]
        if max_violation:
            row = jnp.max(acc, axis=1, keepdims=True)                 # (TI, 1)
        else:
            row = jnp.sum(acc, axis=1, keepdims=True)                 # (TI, 1)
        partial = jnp.sum(row)
        # One full, unmasked (8,128) lane-dense store per i-block; wrapper reads [:,0,0].
        out_ref[...] = jnp.full(out_ref.shape, partial, dtype=jnp.float32)


def cap_only_contrastive_loss(im, s, ex_s, *, margin=0.0, measure='l2',
                              max_violation=False, reduction='mean',
                              tile_i=None, tile_j=None):
    """Pallas equivalent of CapOnlyContrastiveLoss(margin, measure, max_violation,
    reduction)(im, s, ex_s)."""
    im = jnp.asarray(im)
    s = jnp.asarray(s)
    ex_s = jnp.asarray(ex_s)
    assert im.ndim == 2 and s.ndim == 2 and ex_s.ndim == 2
    assert im.shape == s.shape, "diag(sim(im, s)) requires matching (B, D) shapes"
    assert ex_s.shape[1] == im.shape[1]

    n_im, d = im.shape
    n_ex = ex_s.shape[0]
    d_p = _round_up(d, 128)             # zero-pad contraction dim; gram unchanged
    packing = _sublane_packing(im.dtype)
    itemsize = jnp.dtype(im.dtype).itemsize

    limit_cap = _vmem_limit_cap()
    budget = limit_cap - (4 << 20)

    # Tile selection: biggest MXU-friendly tiles whose double-buffered streams +
    # f32 accumulator fit the per-generation VMEM budget.
    auto_ti = auto_tj = 128
    for pref in (512, 256, 128):
        auto_ti = pref if n_im >= pref else _round_up(max(n_im, 1), packing)
        auto_tj = pref if n_ex >= pref else _round_up(max(n_ex, 1), packing)
        if _vmem_bytes(auto_ti, auto_tj, d_p, itemsize) <= budget:
            break
    ti = auto_ti if tile_i is None else tile_i
    tj = auto_tj if tile_j is None else tile_j

    ti = _round_up(ti, packing)
    tj = _round_up(tj, packing)
    if tj < n_ex:
        # Multiple j blocks: the (1, tj) column-vector streams need a lane-aligned
        # (multiple-of-128) block, and a 128-aligned tj keeps the acc lane-dense.
        tj = _round_up(tj, 128)
    n_im_p = _round_up(n_im, ti)
    n_ex_p = _round_up(n_ex, tj)
    gi = n_im_p // ti
    gj = n_ex_p // tj

    # ---- wrapper-side one-shot precompute (O(B*D), all f32) ----
    im32 = im.astype(jnp.float32)
    s32 = s.astype(jnp.float32)
    ex32 = ex_s.astype(jnp.float32)

    if measure == 'l2':
        diag = -jnp.sqrt(jnp.sum((s32 - im32) ** 2, axis=1, keepdims=True))
    else:
        diag = jnp.sum(im32 * s32, axis=1, keepdims=True)
    row_bias = jnp.pad(float(margin) - diag, ((0, n_im_p - n_im), (0, 0)),
                       constant_values=-_BIG)                          # (n_im_p, 1)

    def pad2(x, r, c):
        return jnp.pad(x, ((0, r - x.shape[0]), (0, c - x.shape[1])))

    im_p = pad2(im, n_im_p, d_p)
    ex_p = pad2(ex_s, n_ex_p, d_p)

    vec_i_spec = pl.BlockSpec((ti, 1), lambda i, j: (i, 0))
    vec_j_spec = pl.BlockSpec((1, tj), lambda i, j: (0, j))
    im_spec = pl.BlockSpec((ti, d_p), lambda i, j: (i, 0))
    ex_spec = pl.BlockSpec((tj, d_p), lambda i, j: (j, 0))

    has_col_bias = False
    if measure == 'l2':
        im_sq = jnp.pad(jnp.sum(im32 * im32, axis=1, keepdims=True),
                        ((0, n_im_p - n_im), (0, 0)))                  # (n_im_p, 1)
        ex_sq = jnp.pad(jnp.sum(ex32 * ex32, axis=1, keepdims=True).T,
                        ((0, 0), (0, n_ex_p - n_ex)),
                        constant_values=_BIG)                          # (1, n_ex_p)
        inputs = [row_bias, ex_sq, im_sq, im_p, ex_p]
        in_specs = [vec_i_spec, vec_j_spec, vec_i_spec, im_spec, ex_spec]
    else:
        inputs = [row_bias]
        in_specs = [vec_i_spec]
        if n_ex_p != n_ex:
            has_col_bias = True
            col_bias = jnp.pad(jnp.zeros((1, n_ex), jnp.float32),
                               ((0, 0), (0, n_ex_p - n_ex)), constant_values=-_BIG)
            inputs.append(col_bias)
            in_specs.append(vec_j_spec)
        inputs += [im_p, ex_p]
        in_specs += [im_spec, ex_spec]

    kernel = functools.partial(_cap_only_kernel, measure=measure,
                               max_violation=bool(max_violation),
                               has_col_bias=has_col_bias)

    vmem_need = _vmem_bytes(ti, tj, d_p, itemsize)
    vmem_limit = int(min(limit_cap, max(32 << 20, vmem_need * 3 // 2)))

    cost_est = pl.CostEstimate(
        flops=2 * n_im_p * n_ex_p * d_p,
        transcendentals=(n_im_p * n_ex_p) if measure == 'l2' else 0,
        bytes_accessed=(im_p.size + gi * ex_p.size) * itemsize
                       + (2 * n_im_p + gi * n_ex_p) * 4
                       + gi * 8 * 128 * 4)

    partials = pl.pallas_call(
        kernel,
        out_shape=jax.ShapeDtypeStruct((gi, 8, 128), jnp.float32),
        grid_spec=pltpu.PrefetchScalarGridSpec(
            num_scalar_prefetch=0,
            grid=(gi, gj),
            in_specs=in_specs,
            out_specs=pl.BlockSpec((1, 8, 128), lambda i, j: (i, 0, 0)),
            scratch_shapes=[pltpu.VMEM((ti, tj), jnp.float32)]),
        compiler_params=pltpu.CompilerParams(
            dimension_semantics=("parallel", "arbitrary"),
            vmem_limit_bytes=vmem_limit),
        cost_estimate=cost_est,
    )(*inputs)

    total = jnp.sum(partials[:, 0, 0])
    if reduction == 'mean':
        denom = n_im if max_violation else n_im * n_ex
        return total / denom
    return total


def _reference(im, s, ex_s, *, margin=0.0, measure='l2',
               max_violation=False, reduction='mean'):
    """Pure-JAX replica of the PyTorch CapOnlyContrastiveLoss forward."""
    im = im.astype(jnp.float32)
    s = s.astype(jnp.float32)
    ex = ex_s.astype(jnp.float32)

    def sim(a, b):  # matches l2_sim / cosine_sim: sim(im, X) -> (B_im, B_X)
        if measure == 'l2':
            diff = b[:, None, :] - a[None, :, :]
            return (-jnp.sqrt(jnp.sum(diff * diff, axis=2))).T
        return a @ b.T

    scores = sim(im, ex)
    scores_orig = sim(im, s)
    diag = jnp.diag(scores_orig).reshape(-1, 1)
    cost_s = jnp.maximum(margin + scores - diag, 0.0)
    if max_violation:
        cost_s = cost_s.max(axis=1)
    return cost_s.mean() if reduction == 'mean' else cost_s.sum()


if __name__ == "__main__":
    key = jax.random.PRNGKey(0)
    k_im, k_s, k_ex = jax.random.split(key, 3)
    B, B_ex, D = 20, 200, 32
    im = jax.random.normal(k_im, (B, D), dtype=jnp.float32)
    s = jax.random.normal(k_s, (B, D), dtype=jnp.float32)
    ex_s = jax.random.normal(k_ex, (B_ex, D), dtype=jnp.float32)

    configs = [
        dict(margin=0.0, measure='l2', max_violation=False, reduction='mean'),  # defaults
        dict(margin=0.2, measure='l2', max_violation=True, reduction='sum'),
        dict(margin=0.1, measure='cosine', max_violation=False, reduction='sum'),
        dict(margin=0.2, measure='cosine', max_violation=True, reduction='mean'),
    ]
    for cfg in configs:
        # Small forced tiles: (3, 2) grid with both row and column padding exercised.
        out = cap_only_contrastive_loss(im, s, ex_s, tile_i=8, tile_j=128, **cfg)
        out = jax.block_until_ready(out)
        ref = _reference(im, s, ex_s, **cfg)
        assert jnp.allclose(out, ref, rtol=1e-3, atol=1e-3), (cfg, float(out), float(ref))

    # Auto tile-size path (single tile per grid axis).
    out = jax.block_until_ready(cap_only_contrastive_loss(im, s, ex_s))
    ref = _reference(im, s, ex_s)
    assert jnp.allclose(out, ref, rtol=1e-3, atol=1e-3), (float(out), float(ref))

    print("KERNEL_OK")
</pallas_src>

<mosaic_0001>
module attributes {stable_mosaic.version = 11 : i64} {
  func.func @_cap_only_kernel(%arg0: i32, %arg1: i32, %arg2: memref<8x1xf32, #tpu.memory_space<vmem>>, %arg3: memref<1x128xf32, #tpu.memory_space<vmem>>, %arg4: memref<8x1xf32, #tpu.memory_space<vmem>>, %arg5: memref<8x128xf32, #tpu.memory_space<vmem>>, %arg6: memref<128x128xf32, #tpu.memory_space<vmem>>, %arg7: memref<1x8x128xf32, #tpu.memory_space<vmem>>, %arg8: memref<8x128xf32, #tpu.memory_space<vmem>>) attributes {dimension_semantics = [#tpu.dimension_semantics<parallel>, #tpu.dimension_semantics<arbitrary>], iteration_bounds = array<i64: 3, 2>, scalar_prefetch = 0 : i64, scratch_operands = 1 : i64, tpu.core_type = #tpu.core_type<tc>, window_params = [{transform_indices = @transform_0, window_bounds = array<i64: 8, 1>}, {transform_indices = @transform_1, window_bounds = array<i64: 1, 128>}, {transform_indices = @transform_2, window_bounds = array<i64: 8, 1>}, {transform_indices = @transform_3, window_bounds = array<i64: 8, 128>}, {transform_indices = @transform_4, window_bounds = array<i64: 128, 128>}, {transform_indices = @transform_5, window_bounds = array<i64: 1, 8, 128>}]} {
    %c0_i32 = arith.constant 0 : i32
    %0 = arith.cmpi eq, %arg1, %c0_i32 : i32
    %1 = arith.extui %0 : i1 to i32
    %c0_i32_0 = arith.constant 0 : i32
    %2 = arith.cmpi ne, %1, %c0_i32_0 : i32
    scf.if %2 {
      %cst_18 = arith.constant 0.000000e+00 : f32
      %28 = vector.broadcast %cst_18 : f32 to vector<8x128xf32>
      %c0_19 = arith.constant 0 : index
      %c0_20 = arith.constant 0 : index
      %29 = vector.load %arg8[%c0_19, %c0_20] : memref<8x128xf32, #tpu.memory_space<vmem>>, vector<8x128xf32>
      tpu.vector_store %arg8[%c0_19, %c0_20], %28 {strides = array<i32>} : memref<8x128xf32, #tpu.memory_space<vmem>>, vector<8x128xf32>,
    } else {
    }
    %c0 = arith.constant 0 : index
    %c0_1 = arith.constant 0 : index
    %3 = vector.load %arg5[%c0, %c0_1] : memref<8x128xf32, #tpu.memory_space<vmem>>, vector<8x128xf32>
    %c0_2 = arith.constant 0 : index
    %c0_3 = arith.constant 0 : index
    %4 = vector.load %arg6[%c0_2, %c0_3] : memref<128x128xf32, #tpu.memory_space<vmem>>, vector<128x128xf32>
    %cst = arith.constant dense<0.000000e+00> : vector<8x128xf32>
    %5 = tpu.matmul %3, %4, %cst {dimension_numbers = #tpu.dot_dimension_numbers<[1], [1], [0], [0], [0, 0, 1, 0], [], []>} : vector<8x128xf32>, vector<128x128xf32>, vector<8x128xf32> -> vector<8x128xf32>
    %c0_4 = arith.constant 0 : index
    %c0_5 = arith.constant 0 : index
    %6 = vector.load %arg2[%c0_4, %c0_5] : memref<8x1xf32, #tpu.memory_space<vmem>>, vector<8x1xf32>
    %c0_6 = arith.constant 0 : index
    %c0_7 = arith.constant 0 : index
    %7 = vector.load %arg4[%c0_6, %c0_7] : memref<8x1xf32, #tpu.memory_space<vmem>>, vector<8x1xf32>
    %c0_8 = arith.constant 0 : index
    %c0_9 = arith.constant 0 : index
    %8 = vector.load %arg3[%c0_8, %c0_9] : memref<1x128xf32, #tpu.memory_space<vmem>>, vector<1x128xf32>
    %9 = vector.broadcast %7 : vector<8x1xf32> to vector<8x128xf32>
    %10 = vector.broadcast %8 : vector<1x128xf32> to vector<8x128xf32>
    %11 = arith.addf %9, %10 : vector<8x128xf32>
    %cst_10 = arith.constant 2.000000e+00 : f32
    %12 = vector.broadcast %cst_10 : f32 to vector<8x128xf32>
    %13 = arith.mulf %12, %5 : vector<8x128xf32>
    %14 = arith.subf %11, %13 : vector<8x128xf32>
    %cst_11 = arith.constant 0.000000e+00 : f32
    %15 = vector.broadcast %cst_11 : f32 to vector<8x128xf32>
    %16 = arith.maximumf %14, %15 : vector<8x128xf32>
    %17 = math.sqrt %16 : vector<8x128xf32>
    %18 = vector.broadcast %6 : vector<8x1xf32> to vector<8x128xf32>
    %19 = arith.subf %18, %17 : vector<8x128xf32>
    %cst_12 = arith.constant 0.000000e+00 : f32
    %20 = vector.broadcast %cst_12 : f32 to vector<8x128xf32>
    %21 = arith.maximumf %19, %20 : vector<8x128xf32>
    %c0_13 = arith.constant 0 : index
    %c0_14 = arith.constant 0 : index
    %22 = vector.load %arg8[%c0_13, %c0_14] : memref<8x128xf32, #tpu.memory_space<vmem>>, vector<8x128xf32>
    %23 = arith.addf %22, %21 : vector<8x128xf32>
    %c0_15 = arith.constant 0 : index
    %c0_16 = arith.constant 0 : index
    %24 = vector.load %arg8[%c0_15, %c0_16] : memref<8x128xf32, #tpu.memory_space<vmem>>, vector<8x128xf32>
    tpu.vector_store %arg8[%c0_15, %c0_16], %23 {strides = array<i32>} : memref<8x128xf32, #tpu.memory_space<vmem>>, vector<8x128xf32>,
    %c1_i32 = arith.constant 1 : i32
    %25 = arith.cmpi eq, %arg1, %c1_i32 : i32
    %26 = arith.extui %25 : i1 to i32
    %c0_i32_17 = arith.constant 0 : i32
    %27 = arith.cmpi ne, %26, %c0_i32_17 : i32
    scf.if %27 {
      %c0_18 = arith.constant 0 : index
      %c0_19 = arith.constant 0 : index
      %28 = vector.load %arg8[%c0_18, %c0_19] : memref<8x128xf32, #tpu.memory_space<vmem>>, vector<8x128xf32>
      %cst_20 = arith.constant dense<0.000000e+00> : vector<8xf32>
      %29 = vector.multi_reduction <add>, %28, %cst_20 [1] : vector<8x128xf32> to vector<8xf32>
      %30 = vector.shape_cast %29 : vector<8xf32> to vector<8x1xf32>
      %31 = vector.shape_cast %30 : vector<8x1xf32> to vector<1x8x1xf32>
      %cst_21 = arith.constant dense<0.000000e+00> : vector<1xf32>
      %32 = vector.multi_reduction <add>, %31, %cst_21 [1, 2] : vector<1x8x1xf32> to vector<1xf32>
      %33 = vector.shape_cast %32 : vector<1xf32> to vector<1x1x1xf32>
      %34 = vector.extract %33[0, 0, 0] : f32 from vector<1x1x1xf32>
      %35 = vector.broadcast %34 : f32 to vector<1x8x128xf32>
      %c0_22 = arith.constant 0 : index
      %c0_23 = arith.constant 0 : index
      %c0_24 = arith.constant 0 : index
      %36 = vector.load %arg7[%c0_22, %c0_23, %c0_24] : memref<1x8x128xf32, #tpu.memory_space<vmem>>, vector<1x8x128xf32>
      tpu.vector_store %arg7[%c0_22, %c0_23, %c0_24], %35 {strides = array<i32>} : memref<1x8x128xf32, #tpu.memory_space<vmem>>, vector<1x8x128xf32>,
    } else {
    }
    return
  }
  func.func @transform_0(%arg0: i32, %arg1: i32) -> (i32, i32) {
    %c0_i32 = arith.constant 0 : i32
    %c0_i32_0 = arith.constant 0 : i32
    return %arg0, %c0_i32 : i32, i32
  }
  func.func @transform_1(%arg0: i32, %arg1: i32) -> (i32, i32) {
    %c0_i32 = arith.constant 0 : i32
    %c0_i32_0 = arith.constant 0 : i32
    return %c0_i32, %arg1 : i32, i32
  }
  func.func @transform_2(%arg0: i32, %arg1: i32) -> (i32, i32) {
    %c0_i32 = arith.constant 0 : i32
    %c0_i32_0 = arith.constant 0 : i32
    return %arg0, %c0_i32 : i32, i32
  }
  func.func @transform_3(%arg0: i32, %arg1: i32) -> (i32, i32) {
    %c0_i32 = arith.constant 0 : i32
    %c0_i32_0 = arith.constant 0 : i32
    return %arg0, %c0_i32 : i32, i32
  }
  func.func @transform_4(%arg0: i32, %arg1: i32) -> (i32, i32) {
    %c0_i32 = arith.constant 0 : i32
    %c0_i32_0 = arith.constant 0 : i32
    return %arg1, %c0_i32 : i32, i32
  }
  func.func @transform_5(%arg0: i32, %arg1: i32) -> (i32, i32, i32) {
    %c0_i32 = arith.constant 0 : i32
    %c0_i32_0 = arith.constant 0 : i32
    %c0_i32_1 = arith.constant 0 : i32
    return %arg0, %c0_i32, %c0_i32_0 : i32, i32, i32
  }
}

</mosaic_0001>

<llo_original>
// kernel: tpu_custom_call.1
$region0: #{tpu_custom_call.1}
  #allocation0 [shape = 'u32[]', space=smem, size = 0x4, offset = 0x4, fixed_abs, tag = 'smem constant byte address 0x4 - core index']
  #allocation1 [shape = 'u32[144,128]{1,0:T(1,128)}', space=vmem, size = 0x12000, scoped, tag = 'internal scratch']
  #allocation2 [shape = 'f32[8,128]{1,0:T(8,128)}', space=vmem, size = 0x1000, scoped, tag = 'scratch operand']
  %s0 = inlined_call_operand.vmem [shape: f32[24,1], index: 0, kind: input, shape index: {}]
  %s1 = inlined_call_operand.vmem [shape: f32[1,256], index: 1, kind: input, shape index: {}]
  %s2 = inlined_call_operand.vmem [shape: f32[24,1], index: 2, kind: input, shape index: {}]
  %s3 = inlined_call_operand.vmem [shape: f32[24,128], index: 3, kind: input, shape index: {}]
  %s4 = inlined_call_operand.hbm [shape: f32[256,128], index: 4, kind: input, shape index: {}]
  %s5 = inlined_call_operand.hbm [shape: f32[3,8,128], index: 5, kind: output, shape index: {}]
  %s6 = sld [smem:[#allocation0]]
  $region65: #{tpu_custom_call.1} parent=0
    _
  %s8 = ssub.s32 1, %s6
  %s9 = scalar_select 0, %s8, %s6
  $region1: #{tpu_custom_call.1} parent=0
    #allocation3 [shape = 'u8[131072]{0}', space=vmem, size = 0x20000, scoped, tag = 'input window, operand 4']
    #allocation4 [shape = 's32[2]{0}', space=sflag, size = 0x8, scoped, tag = 'scoped memory for tpu_custom_call.1']
    #allocation5 [shape = 's32[2]{0}', space=sflag, size = 0x8, scoped, tag = 'scoped memory for tpu_custom_call.1']
    #allocation6 [shape = 'u8[8192]{0}', space=vmem, size = 0x2000, scoped, tag = 'output window, operand 0']
    %10 = vsyncpa [#allocation4], 0
    %s11 = scalar_lea.sflag [#allocation4], 1
    %12 = vsyncpa %s11, 0
    %13 = vsyncpa [#allocation5], 0
    %s14 = scalar_lea.sflag [#allocation5], 1
    %15 = vsyncpa %s14, 0
    loop: start=0, step=1, limit=8
    $region2: #{tpu_custom_call.1} parent=1 // loop_pre_header
      _
    $region3: #{tpu_custom_call.1} parent=1 // loop_header
      %s17 = sphi 0, %s21
      %p18 = scmp.ge.s32.totalorder %s17, 8
      %s24 = sphi 0, %s36
      %s25 = sphi 0, %s32
      %s26 = sphi 0, %s24
      %s27 = sphi 0, %s25
      %s28 = sphi 0, %s26
      %s29 = sphi 0, %s27
      %s39 = sphi 0, %s41
      %s42 = sphi 0, %s39
      %s43 = sphi 0, %s42
      %s59 = sphi 0, %s43
      %s65 = sphi 0, %s67
      %s68 = sphi 0, %s65
      %s69 = sphi 0, %s68
      %s85 = sphi 0, %s69
      %s91 = sphi 0, %s93
      %s94 = sphi 0, %s91
      %s95 = sphi 0, %s94
      %s111 = sphi 0, %s95
      %s117 = sphi 0, %s119
      %s120 = sphi 0, %s117
      %s121 = sphi 0, %s120
      %s137 = sphi 0, %s121
      %s143 = sphi 0, %s145
      %s146 = sphi 0, %s143
      %s147 = sphi 0, %s146
      %s163 = sphi 0, %s147
      %s169 = sphi 0, %s171
      %s172 = sphi 0, %s169
      %s173 = sphi 0, %s172
      %s189 = sphi 0, %s173
    $region4: #{tpu_custom_call.1} parent=1 // loop_header_branch
      %20 = sbr.rel (%p18) target = $region8
    $region5: #{tpu_custom_call.1} parent=1 // loop_body
      %s22 = ssub.s32 %s17, 1
      %s23 = ssub.s32 %s17, 2
      %s30 = sadd.s32 1, %s25
      %p31 = scmp.ge.s32.totalorder %s30, 2
      %s32 = scalar_select %p31, 0, %s30
      %s33 = sadd.s32 1, %s24
      %s34 = scalar_select %p31, %s33, %s24
      %p35 = scmp.ge.s32.totalorder %s34, 3
      %s36 = scalar_select %p35, 0, %s34
      %s37 = ssub.s32 %s24, %s36
      %p38 = scmp.eq.s32.totalorder %s37, 0
      %s40 = sadd.s32 %s39, 1
      %s41 = scalar_select %p38, %s39, %s40
      %p44 = pneg %p38
      %p45 = scmp.eq.s32.totalorder %s17, 5
      %p46 = por %p44, %p45
      %p47 = scmp.ne.s32.totalorder %s39, %s42
      %p48 = scmp.eq.s32.totalorder %s17, 0
      %p49 = por %p47, %p48
      %p50 = scmp.ne.s32.totalorder %s39, %s42
      %p51 = scmp.eq.s32.totalorder %s22, 5
      %p52 = por %p50, %p51
      %p53 = scmp.ne.s32.totalorder %s42, %s43
      %p54 = scmp.eq.s32.totalorder %s22, 0
      %p55 = por %p53, %p54
      %p56 = scmp.ne.s32.totalorder %s42, %s43
      %p57 = scmp.eq.s32.totalorder %s23, 5
      %p58 = por %p56, %p57
      %p60 = scmp.ne.s32.totalorder %s43, %s59
      %p61 = scmp.eq.s32.totalorder %s23, 0
      %p62 = por %p60, %p61
      %s63 = ssub.s32 %s25, %s32
      %p64 = scmp.eq.s32.totalorder %s63, 0
      %s66 = sadd.s32 %s65, 1
      %s67 = scalar_select %p64, %s65, %s66
      %p70 = pneg %p64
      %p71 = scmp.eq.s32.totalorder %s17, 5
      %p72 = por %p70, %p71
      %p73 = scmp.ne.s32.totalorder %s65, %s68
      %p74 = scmp.eq.s32.totalorder %s17, 0
      %p75 = por %p73, %p74
      %p76 = scmp.ne.s32.totalorder %s65, %s68
      %p77 = scmp.eq.s32.totalorder %s22, 5
      %p78 = por %p76, %p77
      %p79 = scmp.ne.s32.totalorder %s68, %s69
      %p80 = scmp.eq.s32.totalorder %s22, 0
      %p81 = por %p79, %p80
      %p82 = scmp.ne.s32.totalorder %s68, %s69
      %p83 = scmp.eq.s32.totalorder %s23, 5
      %p84 = por %p82, %p83
      %p86 = scmp.ne.s32.totalorder %s69, %s85
      %p87 = scmp.eq.s32.totalorder %s23, 0
      %p88 = por %p86, %p87
      %s89 = ssub.s32 %s24, %s36
      %p90 = scmp.eq.s32.totalorder %s89, 0
      %s92 = sadd.s32 %s91, 1
      %s93 = scalar_select %p90, %s91, %s92
      %p96 = pneg %p90
      %p97 = scmp.eq.s32.totalorder %s17, 5
      %p98 = por %p96, %p97
      %p99 = scmp.ne.s32.totalorder %s91, %s94
      %p100 = scmp.eq.s32.totalorder %s17, 0
      %p101 = por %p99, %p100
      %p102 = scmp.ne.s32.totalorder %s91, %s94
      %p103 = scmp.eq.s32.totalorder %s22, 5
      %p104 = por %p102, %p103
      %p105 = scmp.ne.s32.totalorder %s94, %s95
      %p106 = scmp.eq.s32.totalorder %s22, 0
      %p107 = por %p105, %p106
      %p108 = scmp.ne.s32.totalorder %s94, %s95
      %p109 = scmp.eq.s32.totalorder %s23, 5
      %p110 = por %p108, %p109
      %p112 = scmp.ne.s32.totalorder %s95, %s111
      %p113 = scmp.eq.s32.totalorder %s23, 0
      %p114 = por %p112, %p113
      %s115 = ssub.s32 %s24, %s36
      %p116 = scmp.eq.s32.totalorder %s115, 0
      %s118 = sadd.s32 %s117, 1
      %s119 = scalar_select %p116, %s117, %s118
      %p122 = pneg %p116
      %p123 = scmp.eq.s32.totalorder %s17, 5
      %p124 = por %p122, %p123
      %p125 = scmp.ne.s32.totalorder %s117, %s120
      %p126 = scmp.eq.s32.totalorder %s17, 0
      %p127 = por %p125, %p126
      %p128 = scmp.ne.s32.totalorder %s117, %s120
      %p129 = scmp.eq.s32.totalorder %s22, 5
      %p130 = por %p128, %p129
      %p131 = scmp.ne.s32.totalorder %s120, %s121
      %p132 = scmp.eq.s32.totalorder %s22, 0
      %p133 = por %p131, %p132
      %p134 = scmp.ne.s32.totalorder %s120, %s121
      %p135 = scmp.eq.s32.totalorder %s23, 5
      %p136 = por %p134, %p135
      %p138 = scmp.ne.s32.totalorder %s121, %s137
      %p139 = scmp.eq.s32.totalorder %s23, 0
      %p140 = por %p138, %p139
      %s141 = ssub.s32 %s25, %s32
      %p142 = scmp.eq.s32.totalorder %s141, 0
      %s144 = sadd.s32 %s143, 1
      %s145 = scalar_select %p142, %s143, %s144
      %p148 = pneg %p142
      %p149 = scmp.eq.s32.totalorder %s17, 5
      %p150 = por %p148, %p149
      %p151 = scmp.ne.s32.totalorder %s143, %s146
      %p152 = scmp.eq.s32.totalorder %s17, 0
      %p153 = por %p151, %p152
      %p154 = scmp.ne.s32.totalorder %s143, %s146
      %p155 = scmp.eq.s32.totalorder %s22, 5
      %p156 = por %p154, %p155
      %p157 = scmp.ne.s32.totalorder %s146, %s147
      %p158 = scmp.eq.s32.totalorder %s22, 0
      %p159 = por %p157, %p158
      %p160 = scmp.ne.s32.totalorder %s146, %s147
      %p161 = scmp.eq.s32.totalorder %s23, 5
      %p162 = por %p160, %p161
      %p164 = scmp.ne.s32.totalorder %s147, %s163
      %p165 = scmp.eq.s32.totalorder %s23, 0
      %p166 = por %p164, %p165
      %s167 = ssub.s32 %s24, %s36
      %p168 = scmp.eq.s32.totalorder %s167, 0
      %s170 = sadd.s32 %s169, 1
      %s171 = scalar_select %p168, %s169, %s170
      %p174 = pneg %p168
      %p175 = scmp.eq.s32.totalorder %s17, 5
      %p176 = por %p174, %p175
      %p177 = scmp.ne.s32.totalorder %s169, %s172
      %p178 = scmp.eq.s32.totalorder %s17, 0
      %p179 = por %p177, %p178
      %p180 = scmp.ne.s32.totalorder %s169, %s172
      %p181 = scmp.eq.s32.totalorder %s22, 5
      %p182 = por %p180, %p181
      %p183 = scmp.ne.s32.totalorder %s172, %s173
      %p184 = scmp.eq.s32.totalorder %s22, 0
      %p185 = por %p183, %p184
      %p186 = scmp.ne.s32.totalorder %s172, %s173
      %p187 = scmp.eq.s32.totalorder %s23, 5
      %p188 = por %p186, %p187
      %p190 = scmp.ne.s32.totalorder %s173, %s189
      %p191 = scmp.eq.s32.totalorder %s23, 0
      %p192 = por %p190, %p191
      %p193 = scmp.le.s32.totalorder 1, %s17
      %p194 = scmp.lt.s32.totalorder %s17, 7
      %p195 = pnand %p193, %p194
      %p196 = pneg %p195
      // Predicated region
      $region9: #{tpu_custom_call.1} parent=5 // pred_check
        _
      $region10: #{tpu_custom_call.1} parent=5 // pred_check_branch
        %198 = sbr.rel (%p195) target = $region12
      $region11: #{tpu_custom_call.1} parent=5 // pred_region
        %s199 = ssub.s32 %s17, 1
      $region12: #{tpu_custom_call.1} parent=5 // pred_fallthru
        _
      %p200 = scmp.lt.s32.totalorder %s17, 6
      // Predicated region
      $region13: #{tpu_custom_call.1} parent=5 // pred_check
        %p201 = pneg %p200
      $region14: #{tpu_custom_call.1} parent=5 // pred_check_branch
        %203 = sbr.rel (%p201) target = $region16
      $region15: #{tpu_custom_call.1} parent=5 // pred_region
        // Predicated region
        $region17: #{tpu_custom_call.1} parent=15 // pred_check
          %p204 = pneg %p49
        $region18: #{tpu_custom_call.1} parent=15 // pred_check_branch
          %206 = sbr.rel (%p204) target = $region20
        $region19: #{tpu_custom_call.1} parent=15 // pred_region
          %p207 = scmp.lt.s32.totalorder %s24, 2
          %s208 = scalar_select %p207, %s24, 2
          %s209 = smul.addr %s208, 8
          %s210 = scalar_lea.vmem %s0, %s209
        $region20: #{tpu_custom_call.1} parent=15 // pred_fallthru
          _
        // Predicated region
        $region21: #{tpu_custom_call.1} parent=15 // pred_check
          %p211 = pneg %p75
        $region22: #{tpu_custom_call.1} parent=15 // pred_check_branch
          %213 = sbr.rel (%p211) target = $region24
        $region23: #{tpu_custom_call.1} parent=15 // pred_region
          %p214 = scmp.lt.s32.totalorder %s25, 1
          %s215 = scalar_select %p214, %s25, 1
          %s216 = scalar_lea.vmem %s1, %s215
        $region24: #{tpu_custom_call.1} parent=15 // pred_fallthru
          _
        // Predicated region
        $region25: #{tpu_custom_call.1} parent=15 // pred_check
          %p217 = pneg %p101
        $region26: #{tpu_custom_call.1} parent=15 // pred_check_branch
          %219 = sbr.rel (%p217) target = $region28
        $region27: #{tpu_custom_call.1} parent=15 // pred_region
          %p220 = scmp.lt.s32.totalorder %s24, 2
          %s221 = scalar_select %p220, %s24, 2
          %s222 = smul.addr %s221, 8
          %s223 = scalar_lea.vmem %s2, %s222
        $region28: #{tpu_custom_call.1} parent=15 // pred_fallthru
          _
        // Predicated region
        $region29: #{tpu_custom_call.1} parent=15 // pred_check
          %p224 = pneg %p127
        $region30: #{tpu_custom_call.1} parent=15 // pred_check_branch
          %226 = sbr.rel (%p224) target = $region32
        $region31: #{tpu_custom_call.1} parent=15 // pred_region
          %p227 = scmp.lt.s32.totalorder %s24, 2
          %s228 = scalar_select %p227, %s24, 2
          %s229 = smul.addr %s228, 8
          %s230 = scalar_lea.vmem %s3, %s229
        $region32: #{tpu_custom_call.1} parent=15 // pred_fallthru
          _
        // Predicated region
        $region33: #{tpu_custom_call.1} parent=15 // pred_check
          %p231 = pneg %p153
        $region34: #{tpu_custom_call.1} parent=15 // pred_check_branch
          %233 = sbr.rel (%p231) target = $region36
        $region35: #{tpu_custom_call.1} parent=15 // pred_region
          %s234 = sand.u32 %s143, 1
          %s235 = scalar_lea.sflag [#allocation4], %s234
          %s236 = sand.u32 %s143, 1
          %s237 = smul.addr %s236, 128
          %s238 = scalar_lea.vmem [#allocation3], %s237
          %s239 = smul.u32 16, %s25
          %s241 = ssub.s32 2048, 2048
          %242 = vsyncadd %s235, %s241
          %s243 = smul.addr %s239, 128
          %s244 = scalar_lea.hbm %s4, %s243
          %s245 = sshll.u32 %s238, 4
          %s246 = int_to_ptr.vmem [resolvable:$true] %s245
          %251 = dma.hbm_to_vmem [thread:$0]  %s244, 2048, %s246, %s235, 128, 128, 8
        $region36: #{tpu_custom_call.1} parent=15 // pred_fallthru
          _
      $region16: #{tpu_custom_call.1} parent=5 // pred_fallthru
        _
      %p252 = scmp.le.s32.totalorder 1, %s17
      %p253 = scmp.lt.s32.totalorder %s17, 7
      %p254 = pnand %p252, %p253
      %p255 = pneg %p254
      // Predicated region
      $region37: #{tpu_custom_call.1} parent=5 // pred_check
        _
      $region38: #{tpu_custom_call.1} parent=5 // pred_check_branch
        %257 = sbr.rel (%p254) target = $region40
      $region39: #{tpu_custom_call.1} parent=5 // pred_region
        %s258 = ssub.s32 %s17, 1
        %s259 = sand.u32 %s146, 1
        %s260 = scalar_lea.sflag [#allocation4], %s259
        %s261 = sand.u32 %s146, 1
        %s262 = smul.addr %s261, 128
        %s263 = scalar_lea.vmem [#allocation3], %s262
        // Predicated region
        $region41: #{tpu_custom_call.1} parent=39 // pred_check
          %p264 = pneg %p159
        $region42: #{tpu_custom_call.1} parent=39 // pred_check_branch
          %266 = sbr.rel (%p264) target = $region44
        $region43: #{tpu_custom_call.1} parent=39 // pred_region
          %267 = dma.done %s260, 2048
        $region44: #{tpu_custom_call.1} parent=39 // pred_fallthru
          _
        %p268 = scmp.lt.s32.totalorder %s26, 2
        %s269 = scalar_select %p268, %s26, 2
        %s270 = smul.addr %s269, 8
        %s271 = scalar_lea.vmem %s0, %s270
        %p272 = pneg %p55
        %p273 = pneg %p52
        %p274 = scmp.lt.s32.totalorder %s27, 1
        %s275 = scalar_select %p274, %s27, 1
        %s276 = scalar_lea.vmem %s1, %s275
        %p277 = pneg %p81
        %p278 = pneg %p78
        %p279 = scmp.lt.s32.totalorder %s26, 2
        %s280 = scalar_select %p279, %s26, 2
        %s281 = smul.addr %s280, 8
        %s282 = scalar_lea.vmem %s2, %s281
        %p283 = pneg %p107
        %p284 = pneg %p104
        %p285 = scmp.lt.s32.totalorder %s26, 2
        %s286 = scalar_select %p285, %s26, 2
        %s287 = smul.addr %s286, 8
        %s288 = scalar_lea.vmem %s3, %s287
        %p289 = pneg %p133
        %p290 = pneg %p130
        %s291 = sand.u32 %s146, 1
        %s292 = scalar_lea.sflag [#allocation4], %s291
        %s293 = sand.u32 %s146, 1
        %s294 = smul.addr %s293, 128
        %s295 = scalar_lea.vmem [#allocation3], %s294
        %p296 = pneg %p159
        %p297 = pneg %p156
        %p298 = pneg %p185
        %p299 = pneg %p182
        %s300 = sand.u32 %s172, 1
        %s301 = scalar_lea.sflag [#allocation5], %s300
        %s302 = sand.u32 %s172, 1
        %s303 = smul.addr %s302, 8
        %s304 = scalar_lea.vmem [#allocation6], %s303
        %p305 = scmp.lt.s32.totalorder %s26, 2
        %s306 = scalar_select %p305, %s26, 2
        %s307 = smul.addr %s306, 8
        %s308 = scalar_lea.vmem %s0, %s307
        %p309 = scmp.lt.s32.totalorder %s27, 1
        %s310 = scalar_select %p309, %s27, 1
        %s311 = scalar_lea.vmem %s1, %s310
        %p312 = scmp.lt.s32.totalorder %s26, 2
        %s313 = scalar_select %p312, %s26, 2
        %s314 = smul.addr %s313, 8
        %s315 = scalar_lea.vmem %s2, %s314
        %p316 = scmp.lt.s32.totalorder %s26, 2
        %s317 = scalar_select %p316, %s26, 2
        %s318 = smul.addr %s317, 8
        %s319 = scalar_lea.vmem %s3, %s318
        %s320 = smul.u32 16, %s27
        %p321 = scmp.eq.s32.totalorder %s27, 0
        // Predicated region
        $region45: #{tpu_custom_call.1} parent=39 // pred_check
          %p322 = pneg %p321
        $region46: #{tpu_custom_call.1} parent=39 // pred_check_branch
          %324 = sbr.rel (%p322) target = $region48
        $region47: #{tpu_custom_call.1} parent=39 // pred_region
          %325 = vst [vmem:[#allocation2] sm:$0xff] 0.0
        $region48: #{tpu_custom_call.1} parent=39 // pred_fallthru
          _
        %v326 = vld [vmem:[%s319] sm:$0xff]
        %v327 = vld [vmem:[%s263] sm:$0xff]
        %v328 = vld [vmem:[%s263 + $0x8] sm:$0xff]
        %v329 = vld [vmem:[%s263 + $0x10] sm:$0xff]
        %v330 = vld [vmem:[%s263 + $0x18] sm:$0xff]
        %v331 = vld [vmem:[%s263 + $0x20] sm:$0xff]
        %v332 = vld [vmem:[%s263 + $0x28] sm:$0xff]
        %v333 = vld [vmem:[%s263 + $0x30] sm:$0xff]
        %v334 = vld [vmem:[%s263 + $0x38] sm:$0xff]
        %v335 = vld [vmem:[%s263 + $0x40] sm:$0xff]
        %v336 = vld [vmem:[%s263 + $0x48] sm:$0xff]
        %v337 = vld [vmem:[%s263 + $0x50] sm:$0xff]
        %v338 = vld [vmem:[%s263 + $0x58] sm:$0xff]
        %v339 = vld [vmem:[%s263 + $0x60] sm:$0xff]
        %v340 = vld [vmem:[%s263 + $0x68] sm:$0xff]
        %v341 = vld [vmem:[%s263 + $0x70] sm:$0xff]
        %v342 = vld [vmem:[%s263 + $0x78] sm:$0xff]
        %343 = vmatprep.subr.mxu0 0.0
        %344 = vmatpush1.xpose.msra.mxu0 %v327
        %345 = vmatprep.subr.mxu0 0.0
        %346 = vmatpush1.xpose.msra.mxu0 %v328
        %347 = vmatprep.subr.mxu0 0.0
        %348 = vmatpush1.xpose.msra.mxu0 %v329
        %349 = vmatprep.subr.mxu0 0.0
        %350 = vmatpush1.xpose.msra.mxu0 %v330
        %351 = vmatprep.subr.mxu0 0.0
        %352 = vmatpush1.xpose.msra.mxu0 %v331
        %353 = vmatprep.subr.mxu0 0.0
        %354 = vmatpush1.xpose.msra.mxu0 %v332
        %355 = vmatprep.subr.mxu0 0.0
        %356 = vmatpush1.xpose.msra.mxu0 %v333
        %357 = vmatprep.subr.mxu0 0.0
        %358 = vmatpush1.xpose.msra.mxu0 %v334
        %359 = vmatprep.subr.mxu0 0.0
        %360 = vmatpush1.xpose.msra.mxu0 %v335
        %361 = vmatprep.subr.mxu0 0.0
        %362 = vmatpush1.xpose.msra.mxu0 %v336
        %363 = vmatprep.subr.mxu0 0.0
        %364 = vmatpush1.xpose.msra.mxu0 %v337
        %365 = vmatprep.subr.mxu0 0.0
        %366 = vmatpush1.xpose.msra.mxu0 %v338
        %367 = vmatprep.subr.mxu0 0.0
        %368 = vmatpush1.xpose.msra.mxu0 %v339
        %369 = vmatprep.subr.mxu0 0.0
        %370 = vmatpush1.xpose.msra.mxu0 %v340
        %371 = vmatprep.subr.mxu0 0.0
        %372 = vmatpush1.xpose.msra.mxu0 %v341
        %373 = vmatprep.subr.mxu0 0.0
        %374 = vmatpush1.xpose.msra.mxu0 %v342
        %375 = vmatprep.subr.mxu0 0.0
        %376 = vmatpush1.xpose.msra.mxu0 0.0
        %377 = vmatprep.subr.mxu0 0.0
        %378 = vmatpush1.xpose.msra.mxu0 0.0
        %379 = vmatprep.subr.mxu0 0.0
        %380 = vmatpush1.xpose.msra.mxu0 0.0
        %381 = vmatprep.subr.mxu0 0.0
        %382 = vmatpush1.xpose.msra.mxu0 0.0
        %383 = vmatprep.subr.mxu0 0.0
        %384 = vmatpush1.xpose.msra.mxu0 0.0
        %385 = vmatprep.subr.mxu0 0.0
        %386 = vmatpush1.xpose.msra.mxu0 0.0
        %387 = vmatprep.subr.mxu0 0.0
        %388 = vmatpush1.xpose.msra.mxu0 0.0
        %389 = vmatprep.subr.mxu0 0.0
        %390 = vmatpush1.xpose.msra.mxu0 0.0
        %391 = vmatprep.subr.mxu0 0.0
        %392 = vmatpush1.xpose.msra.mxu0 0.0
        %393 = vmatprep.subr.mxu0 0.0
        %394 = vmatpush1.xpose.msra.mxu0 0.0
        %395 = vmatprep.subr.mxu0 0.0
        %396 = vmatpush1.xpose.msra.mxu0 0.0
        %397 = vmatprep.subr.mxu0 0.0
        %398 = vmatpush1.xpose.msra.mxu0 0.0
        %399 = vmatprep.subr.mxu0 0.0
        %400 = vmatpush1.xpose.msra.mxu0 0.0
        %401 = vmatprep.subr.mxu0 0.0
        %402 = vmatpush1.xpose.msra.mxu0 0.0
        %403 = vmatprep.subr.mxu0 0.0
        %404 = vmatpush1.xpose.msra.mxu0 0.0
        %405 = vmatprep.subr.mxu0 0.0
        %406 = vmatpush1.xpose.msra.mxu0 0.0
        %407 = vmatprep.mubr.f32.mxu0 0.0
        %408 = vmatmul.mubr.f32.gmra.mrb[0].mxu0 %v326
        %v409 = vpop.f32.mrb[0].mxu0
        %v410 = vadd.f32 0.0, %v409
        %v411 = vpop.f32.mrb[0].mxu0
        %412 = vdwg.mxu0
        %v413 = vld [vmem:[%s308] sm:$0xff]
        %v414 = vld [vmem:[%s315] sm:$0xff]
        %v415 = vld [vmem:[%s311] sm:$0x1]
        %417 = vset.pattern.permute.xlu0 0
        %418 = vperm.xlu0 %417, %v414
        %v419 = vpop.permute.xlu0 %418
        %v422 = vlaneseq
        %v423 = vshrl.u32 %v422, 7
        %v424 = vsub.s32 0, %v423
        %v425 = vrot.slane %v415, %v424
        %v427 = vadd.f32 %v419, %v425
        %v428 = vmul.f32 %v410, 2.0
        %v429 = vsub.f32 %v427, %v428
        %v430 = vmax.f32 %v429, 0.0
        %v431 = vrsqrt.pop %v430
        %v432 = vmul.f32 %v430, %v431
        %vm433 = vcmp.eq.f32.partialorder %v430, inf
        %v434 = vsel %vm433, %v430, %v432
        %vm435 = vcmp.eq.f32.partialorder %v430, 0.0
        %v436 = vand.u32 %v430, 2147483648
        %v437 = vsel %vm435, %v436, %v434
        %439 = vset.pattern.permute.xlu0 0
        %440 = vperm.xlu0 %439, %v413
        %v441 = vpop.permute.xlu0 %440
        %v443 = vsub.f32 %v441, %v437
        %v444 = vmax.f32 %v443, 0.0
        %v445 = vld [vmem:[#allocation2] sm:$0xff]
        %v446 = vadd.f32 %v445, %v444
        %447 = vst [vmem:[#allocation2] sm:$0xff] %v446
        %p448 = scmp.eq.s32.totalorder %s27, 1
        // Predicated region
        $region49: #{tpu_custom_call.1} parent=39 // pred_check
          %p449 = pneg %p448
        $region50: #{tpu_custom_call.1} parent=39 // pred_check_branch
          %451 = sbr.rel (%p449) target = $region52
        $region51: #{tpu_custom_call.1} parent=39 // pred_region
          %v452 = vld [vmem:[#allocation2] sm:$0xff]
          %453 = vadd.xlane.f32.xlu0 %v452
          %v454 = vpop.xlane.xlu0 %453
          %vm455 = vcmask 7168
          %v456 = vsel %vm455, %v454, 0.0
          %457 = vadd.xlane.f32.xlu0 %v456
          %v458 = vpop.xlane.xlu0 %457
          %v459 = vrot.slane %v458, 4
          %v460 = vadd.f32 %v458, %v459
          %v461 = vrot.slane %v460, 2
          %v462 = vadd.f32 %v460, %v461
          %v463 = vrot.slane %v462, 1
          %v464 = vadd.f32 %v462, %v463
          %s465 = vtos %v464
          %v466 = vstv %s465
          %467 = vst [vmem:[%s304] sm:$0xff] %v466
        $region52: #{tpu_custom_call.1} parent=39 // pred_fallthru
          _
        %s468 = sand.u32 %s172, 1
        %s469 = scalar_lea.sflag [#allocation5], %s468
        %s470 = sand.u32 %s172, 1
        %s471 = smul.addr %s470, 8
        %s472 = scalar_lea.vmem [#allocation6], %s471
        // Predicated region
        $region53: #{tpu_custom_call.1} parent=39 // pred_check
          %p473 = pneg %p182
        $region54: #{tpu_custom_call.1} parent=39 // pred_check_branch
          %475 = sbr.rel (%p473) target = $region56
        $region55: #{tpu_custom_call.1} parent=39 // pred_region
          %s477 = ssub.s32 128, 128
          %478 = vsyncadd %s469, %s477
          %s479 = smul.addr %s26, 128
          %s480 = scalar_lea.hbm %s5, %s479
          %s482 = sshll.u32 %s472, 4
          %s483 = int_to_ptr.vmem [resolvable:$true] %s482
          %485 = dma.vmem_to_hbm [thread:$0]  %s483, 128, %s480, %s469
        $region56: #{tpu_custom_call.1} parent=39 // pred_fallthru
          _
      $region40: #{tpu_custom_call.1} parent=5 // pred_fallthru
        _
      %p486 = scmp.le.s32.totalorder 2, %s17
      // Predicated region
      $region57: #{tpu_custom_call.1} parent=5 // pred_check
        %p487 = pneg %p486
      $region58: #{tpu_custom_call.1} parent=5 // pred_check_branch
        %489 = sbr.rel (%p487) target = $region60
      $region59: #{tpu_custom_call.1} parent=5 // pred_region
        %s490 = ssub.s32 %s17, 2
        // Predicated region
        $region61: #{tpu_custom_call.1} parent=59 // pred_check
          %p491 = pneg %p188
        $region62: #{tpu_custom_call.1} parent=59 // pred_check_branch
          %493 = sbr.rel (%p491) target = $region64
        $region63: #{tpu_custom_call.1} parent=59 // pred_region
          %s494 = sand.u32 %s173, 1
          %s495 = scalar_lea.sflag [#allocation5], %s494
          %s496 = sand.u32 %s173, 1
          %s497 = smul.addr %s496, 8
          %s498 = scalar_lea.vmem [#allocation6], %s497
          %499 = dma.done %s495, 128
        $region64: #{tpu_custom_call.1} parent=59 // pred_fallthru
          _
      $region60: #{tpu_custom_call.1} parent=5 // pred_fallthru
        _
    $region6: #{tpu_custom_call.1} parent=1 // loop_footer
      %s21 = sadd.s32 1, %s17
    $region7: #{tpu_custom_call.1} parent=1 // loop_footer_branch
      %16 = sbr.rel target = $region3
    $region8: #{tpu_custom_call.1} parent=1 // loop_exit
      _
    %500 = vsyncpa [#allocation4], 1
    %s501 = scalar_lea.sflag [#allocation4], 1
    %502 = vsyncpa %s501, 1
    %503 = vsyncpa [#allocation5], 1
    %s504 = scalar_lea.sflag [#allocation5], 1
    %505 = vsyncpa %s504, 1

</llo_original>
